<compile_context>
chip_gen: v7x
topology: tpu7x:2x2x1
jax: 0.10.0
libtpu: 0.0.40
codegen_flags: <defaults>
</compile_context>

<pallas_src>
import functools

import jax
import jax.numpy as jnp
from jax.experimental import pallas as pl
from jax.experimental.pallas import tpu as pltpu

LANE = 128  # output/lane width of every weight block (lane-dense stores)
KPAD = 16   # contraction-dim padding = bf16 sublane pack (covers in=2, hidden=16)


def gnn_kernel(slab_ref, b_ref, o_ref, *, n_nodes, n_valid_out):
    """slab: (2*N + 9*KPAD, LANE) bf16  = [x_pad; A_pad; 9 weight blocks]
    b:    (6, LANE) f32 biases
    o:    (N, LANE) f32 softmax output (padded lanes are exactly 0)."""
    n = n_nodes
    x_off, a_off, w_off = 0, n, 2 * n

    # Adjacency (row-normalized, dense): real (N, N) block of the slab.
    a = slab_ref[a_off:a_off + n, :n]                       # (N, N) bf16

    def wblk(i):
        # i-th 16-row weight block, (KPAD, LANE) bf16. Static slice -> free view.
        start = w_off + i * KPAD
        return slab_ref[start:start + KPAD, :]

    def sage(h, layer):
        # h: (N, KPAD) bf16.  Two K=16 MXU pushes, f32 accumulate, one add.
        agg = jnp.dot(a, h, preferred_element_type=jnp.float32)      # (N, KPAD)
        z = (jnp.dot(h, wblk(2 * layer), preferred_element_type=jnp.float32)
             + jnp.dot(agg.astype(jnp.bfloat16), wblk(2 * layer + 1),
                       preferred_element_type=jnp.float32)
             + b_ref[layer:layer + 1, :])                             # (N, LANE)
        return jnp.tanh(z[:, :KPAD]).astype(jnp.bfloat16)             # (N, KPAD)

    def linear(h, w_idx, b_idx):
        return (jnp.dot(h, wblk(w_idx), preferred_element_type=jnp.float32)
                + b_ref[b_idx:b_idx + 1, :])                          # (N, LANE)

    # --- forward chain -----------------------------------------------------
    h = slab_ref[x_off:x_off + n, :KPAD]                    # (N, KPAD) bf16
    h = sage(h, 0)
    h = sage(h, 1)
    h = sage(h, 2)
    h = jnp.tanh(linear(h, 6, 3)[:, :KPAD]).astype(jnp.bfloat16)
    h = jnp.tanh(linear(h, 7, 4)[:, :KPAD]).astype(jnp.bfloat16)
    logits = linear(h, 8, 5)                                # (N, LANE) f32

    # softmax over the real output channels only: mask padded lanes to -inf so
    # they contribute 0 (padded output lanes end up exactly 0).
    lane_idx = jax.lax.broadcasted_iota(jnp.int32, logits.shape, 1)
    logits = jnp.where(lane_idx < n_valid_out, logits, -jnp.inf)
    m = jnp.max(logits, axis=1, keepdims=True)
    e = jnp.exp(logits - m)
    denom = jnp.sum(e, axis=1, keepdims=True)
    o_ref[...] = e * pl.reciprocal(denom, approx=False)     # exact recip + VPU mul


def _pad_block(w):
    """Zero-pad a weight block to (KPAD rows) x (LANE cols). Requires r<=16, c<=128."""
    r, c = w.shape
    return jnp.pad(w, ((0, KPAD - r), (0, LANE - c)))


def pack_inputs(x, a_mean, params):
    """One bf16 slab holding x, A and all weights; one f32 slab holding biases."""
    n, c_in = x.shape
    assert n <= LANE, "whole-graph-in-VMEM layout assumes N <= 128"
    x_pad = jnp.pad(x, ((0, 0), (0, LANE - c_in)))
    a_pad = jnp.pad(a_mean, ((0, 0), (0, LANE - n)))

    wblocks = []
    for s_name, n_name in (("w0s", "w0n"), ("w1s", "w1n"), ("w2s", "w2n")):
        wblocks += [_pad_block(params[s_name]), _pad_block(params[n_name])]
    for name in ("wl0", "wl1", "wf"):
        wblocks.append(_pad_block(params[name]))

    slab = jnp.concatenate([x_pad, a_pad] + wblocks, axis=0).astype(jnp.bfloat16)

    b_slab = jnp.concatenate(
        [jnp.pad(params[k], ((0, 0), (0, LANE - params[k].shape[1])))
         for k in ("b0", "b1", "b2", "bl0", "bl1", "bf")],
        axis=0).astype(jnp.float32)                          # (6, LANE)
    return slab, b_slab


def model_partitioning_forward(x, a_mean, params):
    n, _ = x.shape
    out_channels = params["wf"].shape[1]
    slab, b_slab = pack_inputs(x, a_mean, params)

    vmem = pl.BlockSpec(memory_space=pltpu.MemorySpace.VMEM)
    kernel = functools.partial(gnn_kernel, n_nodes=n, n_valid_out=out_channels)

    out_pad = pl.pallas_call(
        kernel,
        out_shape=jax.ShapeDtypeStruct((n, LANE), jnp.float32),
        in_specs=[vmem, vmem],
        out_specs=vmem,
    )(slab, b_slab)

    return out_pad[:, :out_channels]


def forward_reference(x, a_mean, params):
    """Pure-JAX f32 reference of the same forward pass (for a sanity check)."""
    def sage(h, ws, wn, b):
        return (a_mean @ h) @ wn + h @ ws + b
    h = jnp.tanh(sage(x, params["w0s"], params["w0n"], params["b0"]))
    h = jnp.tanh(sage(h, params["w1s"], params["w1n"], params["b1"]))
    h = jnp.tanh(sage(h, params["w2s"], params["w2n"], params["b2"]))
    h = jnp.tanh(h @ params["wl0"] + params["bl0"])
    h = jnp.tanh(h @ params["wl1"] + params["bl1"])
    logits = h @ params["wf"] + params["bf"]
    return jax.nn.softmax(logits, axis=1)


def init_params(key, input_channels, hidden_channels, output_channels):
    """Deterministic synthetic weights; stored as (in, out) for h @ W."""
    ks = jax.random.split(key, 16)

    def w(k, i, o):
        return jax.random.normal(k, (i, o), jnp.float32) / jnp.sqrt(i)

    ic, hc, oc = input_channels, hidden_channels, output_channels
    return {
        "w0s": w(ks[0], ic, hc), "w0n": w(ks[1], ic, hc),
        "b0": jax.random.normal(ks[2], (1, hc), jnp.float32) * 0.1,
        "w1s": w(ks[3], hc, hc), "w1n": w(ks[4], hc, hc),
        "b1": jax.random.normal(ks[5], (1, hc), jnp.float32) * 0.1,
        "w2s": w(ks[6], hc, hc), "w2n": w(ks[7], hc, hc),
        "b2": jax.random.normal(ks[8], (1, hc), jnp.float32) * 0.1,
        "wl0": w(ks[9], hc, hc),
        "bl0": jax.random.normal(ks[10], (1, hc), jnp.float32) * 0.1,
        "wl1": w(ks[11], hc, hc),
        "bl1": jax.random.normal(ks[12], (1, hc), jnp.float32) * 0.1,
        "wf": w(ks[13], hc, oc),
        "bf": jax.random.normal(ks[14], (1, oc), jnp.float32) * 0.1,
    }


def build_mean_adjacency(edge_index, num_nodes):
    """Dense row-normalized adjacency: A[dst, src] = 1/in_degree(dst)."""
    src, dst = edge_index
    a = jnp.zeros((num_nodes, num_nodes), jnp.float32)
    a = a.at[dst, src].add(1.0)
    deg = jnp.sum(a, axis=1, keepdims=True)
    # Nodes with no incoming edges aggregate zeros (matches PyG mean aggr).
    return jnp.where(deg > 0, a / jnp.where(deg > 0, deg, 1.0), 0.0)


if __name__ == "__main__":
    key = jax.random.PRNGKey(0)
    k_x, k_e, k_p = jax.random.split(key, 3)

    num_nodes = 16
    input_channels = 2
    hidden_channels = 16
    output_channels = 2
    num_edges = 48

    # Synthetic graph: node features (N, C_in) and random directed edges.
    x = jax.random.normal(k_x, (num_nodes, input_channels), jnp.float32)
    edge_index = jax.random.randint(k_e, (2, num_edges), 0, num_nodes)
    a_mean = build_mean_adjacency(edge_index, num_nodes)

    params = init_params(k_p, input_channels, hidden_channels, output_channels)

    out = model_partitioning_forward(x, a_mean, params)
    out = jax.block_until_ready(out)

    assert out.shape == (num_nodes, output_channels)
    # Softmax rows must sum to 1.
    assert bool(jnp.allclose(jnp.sum(out, axis=1), 1.0, atol=1e-5))
    # Match the f32 pure-JAX reference (loose tolerance: bf16 MXU feeds).
    ref = forward_reference(x, a_mean, params)
    assert bool(jnp.allclose(out, ref, atol=0.1)), float(jnp.max(jnp.abs(out - ref)))
    print("KERNEL_OK")
</pallas_src>

<mosaic_0001>
module attributes {stable_mosaic.version = 11 : i64} {
  func.func @gnn_kernel(%arg0: memref<176x128xbf16, #tpu.memory_space<vmem>>, %arg1: memref<6x128xf32, #tpu.memory_space<vmem>>, %arg2: memref<16x128xf32, #tpu.memory_space<vmem>>) attributes {dimension_semantics = [], scalar_prefetch = 0 : i64, scratch_operands = 0 : i64, tpu.core_type = #tpu.core_type<tc>} {
    %c16 = arith.constant 16 : index
    %c0 = arith.constant 0 : index
    %0 = vector.load %arg0[%c16, %c0] : memref<176x128xbf16, #tpu.memory_space<vmem>>, vector<16x16xbf16>
    %c0_0 = arith.constant 0 : index
    %c0_1 = arith.constant 0 : index
    %1 = vector.load %arg0[%c0_0, %c0_1] : memref<176x128xbf16, #tpu.memory_space<vmem>>, vector<16x16xbf16>
    %cst = arith.constant dense<0.000000e+00> : vector<16x16xf32>
    %2 = tpu.matmul %0, %1, %cst {dimension_numbers = #tpu.dot_dimension_numbers<[1], [0], [0], [1], [0, 0, 1, 1], [], []>} : vector<16x16xbf16>, vector<16x16xbf16>, vector<16x16xf32> -> vector<16x16xf32>
    %c32 = arith.constant 32 : index
    %c0_2 = arith.constant 0 : index
    %3 = vector.load %arg0[%c32, %c0_2] : memref<176x128xbf16, #tpu.memory_space<vmem>>, vector<16x128xbf16>
    %cst_3 = arith.constant dense<0.000000e+00> : vector<16x128xf32>
    %4 = tpu.matmul %1, %3, %cst_3 {dimension_numbers = #tpu.dot_dimension_numbers<[1], [0], [0], [1], [0, 0, 1, 1], [], []>} : vector<16x16xbf16>, vector<16x128xbf16>, vector<16x128xf32> -> vector<16x128xf32>
    %5 = arith.truncf %2 : vector<16x16xf32> to vector<16x16xbf16>
    %c48 = arith.constant 48 : index
    %c0_4 = arith.constant 0 : index
    %6 = vector.load %arg0[%c48, %c0_4] : memref<176x128xbf16, #tpu.memory_space<vmem>>, vector<16x128xbf16>
    %cst_5 = arith.constant dense<0.000000e+00> : vector<16x128xf32>
    %7 = tpu.matmul %5, %6, %cst_5 {dimension_numbers = #tpu.dot_dimension_numbers<[1], [0], [0], [1], [0, 0, 1, 1], [], []>} : vector<16x16xbf16>, vector<16x128xbf16>, vector<16x128xf32> -> vector<16x128xf32>
    %8 = arith.addf %4, %7 : vector<16x128xf32>
    %c0_6 = arith.constant 0 : index
    %c0_7 = arith.constant 0 : index
    %9 = vector.load %arg1[%c0_6, %c0_7] : memref<6x128xf32, #tpu.memory_space<vmem>>, vector<1x128xf32>
    %10 = vector.broadcast %9 : vector<1x128xf32> to vector<16x128xf32>
    %11 = arith.addf %8, %10 : vector<16x128xf32>
    %12 = vector.extract_strided_slice %11 {offsets = [0, 0], sizes = [16, 16], strides = [1, 1]} : vector<16x128xf32> to vector<16x16xf32>
    %13 = math.tanh %12 : vector<16x16xf32>
    %14 = arith.truncf %13 : vector<16x16xf32> to vector<16x16xbf16>
    %cst_8 = arith.constant dense<0.000000e+00> : vector<16x16xf32>
    %15 = tpu.matmul %0, %14, %cst_8 {dimension_numbers = #tpu.dot_dimension_numbers<[1], [0], [0], [1], [0, 0, 1, 1], [], []>} : vector<16x16xbf16>, vector<16x16xbf16>, vector<16x16xf32> -> vector<16x16xf32>
    %c64 = arith.constant 64 : index
    %c0_9 = arith.constant 0 : index
    %16 = vector.load %arg0[%c64, %c0_9] : memref<176x128xbf16, #tpu.memory_space<vmem>>, vector<16x128xbf16>
    %cst_10 = arith.constant dense<0.000000e+00> : vector<16x128xf32>
    %17 = tpu.matmul %14, %16, %cst_10 {dimension_numbers = #tpu.dot_dimension_numbers<[1], [0], [0], [1], [0, 0, 1, 1], [], []>} : vector<16x16xbf16>, vector<16x128xbf16>, vector<16x128xf32> -> vector<16x128xf32>
    %18 = arith.truncf %15 : vector<16x16xf32> to vector<16x16xbf16>
    %c80 = arith.constant 80 : index
    %c0_11 = arith.constant 0 : index
    %19 = vector.load %arg0[%c80, %c0_11] : memref<176x128xbf16, #tpu.memory_space<vmem>>, vector<16x128xbf16>
    %cst_12 = arith.constant dense<0.000000e+00> : vector<16x128xf32>
    %20 = tpu.matmul %18, %19, %cst_12 {dimension_numbers = #tpu.dot_dimension_numbers<[1], [0], [0], [1], [0, 0, 1, 1], [], []>} : vector<16x16xbf16>, vector<16x128xbf16>, vector<16x128xf32> -> vector<16x128xf32>
    %21 = arith.addf %17, %20 : vector<16x128xf32>
    %c1 = arith.constant 1 : index
    %c0_13 = arith.constant 0 : index
    %22 = vector.load %arg1[%c1, %c0_13] : memref<6x128xf32, #tpu.memory_space<vmem>>, vector<1x128xf32>
    %23 = vector.broadcast %22 : vector<1x128xf32> to vector<16x128xf32>
    %24 = arith.addf %21, %23 : vector<16x128xf32>
    %25 = vector.extract_strided_slice %24 {offsets = [0, 0], sizes = [16, 16], strides = [1, 1]} : vector<16x128xf32> to vector<16x16xf32>
    %26 = math.tanh %25 : vector<16x16xf32>
    %27 = arith.truncf %26 : vector<16x16xf32> to vector<16x16xbf16>
    %cst_14 = arith.constant dense<0.000000e+00> : vector<16x16xf32>
    %28 = tpu.matmul %0, %27, %cst_14 {dimension_numbers = #tpu.dot_dimension_numbers<[1], [0], [0], [1], [0, 0, 1, 1], [], []>} : vector<16x16xbf16>, vector<16x16xbf16>, vector<16x16xf32> -> vector<16x16xf32>
    %c96 = arith.constant 96 : index
    %c0_15 = arith.constant 0 : index
    %29 = vector.load %arg0[%c96, %c0_15] : memref<176x128xbf16, #tpu.memory_space<vmem>>, vector<16x128xbf16>
    %cst_16 = arith.constant dense<0.000000e+00> : vector<16x128xf32>
    %30 = tpu.matmul %27, %29, %cst_16 {dimension_numbers = #tpu.dot_dimension_numbers<[1], [0], [0], [1], [0, 0, 1, 1], [], []>} : vector<16x16xbf16>, vector<16x128xbf16>, vector<16x128xf32> -> vector<16x128xf32>
    %31 = arith.truncf %28 : vector<16x16xf32> to vector<16x16xbf16>
    %c112 = arith.constant 112 : index
    %c0_17 = arith.constant 0 : index
    %32 = vector.load %arg0[%c112, %c0_17] : memref<176x128xbf16, #tpu.memory_space<vmem>>, vector<16x128xbf16>
    %cst_18 = arith.constant dense<0.000000e+00> : vector<16x128xf32>
    %33 = tpu.matmul %31, %32, %cst_18 {dimension_numbers = #tpu.dot_dimension_numbers<[1], [0], [0], [1], [0, 0, 1, 1], [], []>} : vector<16x16xbf16>, vector<16x128xbf16>, vector<16x128xf32> -> vector<16x128xf32>
    %34 = arith.addf %30, %33 : vector<16x128xf32>
    %c2 = arith.constant 2 : index
    %c0_19 = arith.constant 0 : index
    %35 = vector.load %arg1[%c2, %c0_19] : memref<6x128xf32, #tpu.memory_space<vmem>>, vector<1x128xf32>
    %36 = vector.broadcast %35 : vector<1x128xf32> to vector<16x128xf32>
    %37 = arith.addf %34, %36 : vector<16x128xf32>
    %38 = vector.extract_strided_slice %37 {offsets = [0, 0], sizes = [16, 16], strides = [1, 1]} : vector<16x128xf32> to vector<16x16xf32>
    %39 = math.tanh %38 : vector<16x16xf32>
    %40 = arith.truncf %39 : vector<16x16xf32> to vector<16x16xbf16>
    %c128 = arith.constant 128 : index
    %c0_20 = arith.constant 0 : index
    %41 = vector.load %arg0[%c128, %c0_20] : memref<176x128xbf16, #tpu.memory_space<vmem>>, vector<16x128xbf16>
    %cst_21 = arith.constant dense<0.000000e+00> : vector<16x128xf32>
    %42 = tpu.matmul %40, %41, %cst_21 {dimension_numbers = #tpu.dot_dimension_numbers<[1], [0], [0], [1], [0, 0, 1, 1], [], []>} : vector<16x16xbf16>, vector<16x128xbf16>, vector<16x128xf32> -> vector<16x128xf32>
    %c3 = arith.constant 3 : index
    %c0_22 = arith.constant 0 : index
    %43 = vector.load %arg1[%c3, %c0_22] : memref<6x128xf32, #tpu.memory_space<vmem>>, vector<1x128xf32>
    %44 = vector.broadcast %43 : vector<1x128xf32> to vector<16x128xf32>
    %45 = arith.addf %42, %44 : vector<16x128xf32>
    %46 = vector.extract_strided_slice %45 {offsets = [0, 0], sizes = [16, 16], strides = [1, 1]} : vector<16x128xf32> to vector<16x16xf32>
    %47 = math.tanh %46 : vector<16x16xf32>
    %48 = arith.truncf %47 : vector<16x16xf32> to vector<16x16xbf16>
    %c144 = arith.constant 144 : index
    %c0_23 = arith.constant 0 : index
    %49 = vector.load %arg0[%c144, %c0_23] : memref<176x128xbf16, #tpu.memory_space<vmem>>, vector<16x128xbf16>
    %cst_24 = arith.constant dense<0.000000e+00> : vector<16x128xf32>
    %50 = tpu.matmul %48, %49, %cst_24 {dimension_numbers = #tpu.dot_dimension_numbers<[1], [0], [0], [1], [0, 0, 1, 1], [], []>} : vector<16x16xbf16>, vector<16x128xbf16>, vector<16x128xf32> -> vector<16x128xf32>
    %c4 = arith.constant 4 : index
    %c0_25 = arith.constant 0 : index
    %51 = vector.load %arg1[%c4, %c0_25] : memref<6x128xf32, #tpu.memory_space<vmem>>, vector<1x128xf32>
    %52 = vector.broadcast %51 : vector<1x128xf32> to vector<16x128xf32>
    %53 = arith.addf %50, %52 : vector<16x128xf32>
    %54 = vector.extract_strided_slice %53 {offsets = [0, 0], sizes = [16, 16], strides = [1, 1]} : vector<16x128xf32> to vector<16x16xf32>
    %55 = math.tanh %54 : vector<16x16xf32>
    %56 = arith.truncf %55 : vector<16x16xf32> to vector<16x16xbf16>
    %c160 = arith.constant 160 : index
    %c0_26 = arith.constant 0 : index
    %57 = vector.load %arg0[%c160, %c0_26] : memref<176x128xbf16, #tpu.memory_space<vmem>>, vector<16x128xbf16>
    %cst_27 = arith.constant dense<0.000000e+00> : vector<16x128xf32>
    %58 = tpu.matmul %56, %57, %cst_27 {dimension_numbers = #tpu.dot_dimension_numbers<[1], [0], [0], [1], [0, 0, 1, 1], [], []>} : vector<16x16xbf16>, vector<16x128xbf16>, vector<16x128xf32> -> vector<16x128xf32>
    %c5 = arith.constant 5 : index
    %c0_28 = arith.constant 0 : index
    %59 = vector.load %arg1[%c5, %c0_28] : memref<6x128xf32, #tpu.memory_space<vmem>>, vector<1x128xf32>
    %60 = vector.broadcast %59 : vector<1x128xf32> to vector<16x128xf32>
    %61 = arith.addf %58, %60 : vector<16x128xf32>
    %62 = tpu.iota {dimensions = array<i32: 1>} : vector<16x128xi32>
    %c2_i32 = arith.constant 2 : i32
    %63 = vector.broadcast %c2_i32 : i32 to vector<16x128xi32>
    %64 = arith.cmpi slt, %62, %63 : vector<16x128xi32>
    %cst_29 = arith.constant 0xFF800000 : f32
    %65 = vector.broadcast %cst_29 : f32 to vector<16x128xf32>
    %66 = arith.select %64, %61, %65 : vector<16x128xi1>, vector<16x128xf32>
    %cst_30 = arith.constant dense<0xFF800000> : vector<16xf32>
    %67 = vector.multi_reduction <maximumf>, %66, %cst_30 [1] : vector<16x128xf32> to vector<16xf32>
    %68 = vector.shape_cast %67 : vector<16xf32> to vector<16x1xf32>
    %69 = vector.broadcast %68 : vector<16x1xf32> to vector<16x128xf32>
    %70 = arith.subf %66, %69 : vector<16x128xf32>
    %71 = math.exp %70 : vector<16x128xf32>
    %cst_31 = arith.constant dense<0.000000e+00> : vector<16xf32>
    %72 = vector.multi_reduction <add>, %71, %cst_31 [1] : vector<16x128xf32> to vector<16xf32>
    %73 = vector.shape_cast %72 : vector<16xf32> to vector<16x1xf32>
    %74 = tpu.reciprocal %73 : vector<16x1xf32> -> vector<16x1xf32>
    %75 = vector.broadcast %74 : vector<16x1xf32> to vector<16x128xf32>
    %76 = arith.mulf %71, %75 : vector<16x128xf32>
    %c0_32 = arith.constant 0 : index
    %c0_33 = arith.constant 0 : index
    %77 = vector.load %arg2[%c0_32, %c0_33] : memref<16x128xf32, #tpu.memory_space<vmem>>, vector<16x128xf32>
    tpu.vector_store %arg2[%c0_32, %c0_33], %76 {strides = array<i32>} : memref<16x128xf32, #tpu.memory_space<vmem>>, vector<16x128xf32>,
    return
  }
}

</mosaic_0001>

<llo_original>
// kernel: tpu_custom_call.1
$region0: #{tpu_custom_call.1}
  #allocation0 [shape = 'u32[]', space=smem, size = 0x4, offset = 0x4, fixed_abs, tag = 'smem constant byte address 0x4 - core index']
  #allocation1 [shape = 'u32[144,128]{1,0:T(1,128)}', space=vmem, size = 0x12000, scoped, tag = 'internal scratch']
  %s0 = inlined_call_operand.hbm [shape: bf16[176,128], index: 0, kind: input, shape index: {}]
  %s1 = inlined_call_operand.hbm [shape: f32[6,128], index: 1, kind: input, shape index: {}]
  %s2 = inlined_call_operand.hbm [shape: f32[16,128], index: 2, kind: output, shape index: {}]
  %s3 = sld [smem:[#allocation0]]
  $region26: #{tpu_custom_call.1} parent=0
    _
  %s5 = ssub.s32 1, %s3
  %s6 = scalar_select 0, %s5, %s3
  $region1: #{tpu_custom_call.1} parent=0
    #allocation2 [shape = 'u8[45056]{0}', space=vmem, size = 0xb000, scoped, tag = 'input window, operand 0, single buffered']
    #allocation3 [shape = 's32[1]{0}', space=sflag, size = 0x4, scoped, tag = 'scoped memory for tpu_custom_call.1']
    #allocation4 [shape = 's32[1]{0}', space=sflag, size = 0x4, scoped, tag = 'scoped memory for tpu_custom_call.1']
    #allocation5 [shape = 'u8[4096]{0}', space=vmem, size = 0x1000, scoped, tag = 'input window, operand 1, single buffered']
    #allocation6 [shape = 's32[1]{0}', space=sflag, size = 0x4, scoped, tag = 'scoped memory for tpu_custom_call.1']
    #allocation7 [shape = 'u8[8192]{0}', space=vmem, size = 0x2000, scoped, tag = 'output window, operand 0, single buffered']
    %7 = vsyncpa [#allocation3], 0
    %8 = vsyncpa [#allocation6], 0
    %9 = vsyncpa [#allocation4], 0
    // Predicated region
    $region2: #{tpu_custom_call.1} parent=1 // pred_check
      _
    $region3: #{tpu_custom_call.1} parent=1 // pred_check_branch
      %11 = sbr.rel (0) target = $region5
    $region4: #{tpu_custom_call.1} parent=1 // pred_region
      %s13 = ssub.s32 1408, 1408
      %14 = vsyncadd [#allocation3], %s13
      %s15 = sshll.u32 [#allocation2], 4
      %s16 = int_to_ptr.vmem [resolvable:$true] %s15
      %21 = dma.hbm_to_vmem [thread:$0]  %s0, 1408, %s16, [#allocation3], 64, 64, 4
    $region5: #{tpu_custom_call.1} parent=1 // pred_fallthru
      _
    // Predicated region
    $region6: #{tpu_custom_call.1} parent=1 // pred_check
      _
    $region7: #{tpu_custom_call.1} parent=1 // pred_check_branch
      %23 = sbr.rel (0) target = $region9
    $region8: #{tpu_custom_call.1} parent=1 // pred_region
      %s25 = ssub.s32 128, 128
      %26 = vsyncadd [#allocation6], %s25
      %s28 = sshll.u32 [#allocation5], 4
      %s29 = int_to_ptr.vmem [resolvable:$true] %s28
      %31 = dma.hbm_to_vmem [thread:$0]  %s1, 128, %s29, [#allocation6]
    $region9: #{tpu_custom_call.1} parent=1 // pred_fallthru
      _
    // Predicated region
    $region10: #{tpu_custom_call.1} parent=1 // pred_check
      _
    $region11: #{tpu_custom_call.1} parent=1 // pred_check_branch
      %33 = sbr.rel (0) target = $region13
    $region12: #{tpu_custom_call.1} parent=1 // pred_region
      %34 = dma.done [#allocation3], 1408
    $region13: #{tpu_custom_call.1} parent=1 // pred_fallthru
      _
    // Predicated region
    $region14: #{tpu_custom_call.1} parent=1 // pred_check
      _
    $region15: #{tpu_custom_call.1} parent=1 // pred_check_branch
      %36 = sbr.rel (0) target = $region17
    $region16: #{tpu_custom_call.1} parent=1 // pred_region
      %37 = dma.done [#allocation6], 128
    $region17: #{tpu_custom_call.1} parent=1 // pred_fallthru
      _
    %v39 = vld [vmem:[#allocation2 + $0x8] sm:$0xf]
    %v40 = vld [vmem:[#allocation2 + $0xc] sm:$0xf]
    %v41 = vld [vmem:[#allocation2] sm:$0xf]
    %v42 = vld [vmem:[#allocation2 + $0x4] sm:$0xf]
    %v45 = vunpack.c.l.b16 %v39
    %v46 = vunpack.c.l.b16 %v40
    %v47 = vpack.c.b16 %v46, %v45
    %v50 = vunpack.c.l.b16 %v41
    %v51 = vunpack.c.l.b16 %v42
    %v52 = vpack.c.b16 %v51, %v50
    %vm54 = vcmask 130048
    %v56 = vsel %vm54, %v47, 0
    %58 = vmatprep.subr.bf16.mxu0 0
    %59 = vmatpush1.bf16.msra.mxu0 %v52
    %60 = vmatprep.subr.bf16.mxu0 0
    %61 = vmatpush1.bf16.msra.mxu0 0
    %62 = vmatprep.subr.bf16.mxu0 0
    %63 = vmatpush1.bf16.msra.mxu0 0
    %64 = vmatprep.subr.bf16.mxu0 0
    %65 = vmatpush1.bf16.msra.mxu0 0
    %66 = vmatprep.subr.bf16.mxu0 0
    %67 = vmatpush1.bf16.msra.mxu0 0
    %68 = vmatprep.subr.bf16.mxu0 0
    %69 = vmatpush1.bf16.msra.mxu0 0
    %70 = vmatprep.subr.bf16.mxu0 0
    %71 = vmatpush1.bf16.msra.mxu0 0
    %72 = vmatprep.subr.bf16.mxu0 0
    %73 = vmatpush1.bf16.msra.mxu0 0
    %74 = vmatprep.subr.bf16.mxu0 0
    %75 = vmatpush1.bf16.msra.mxu0 0
    %76 = vmatprep.subr.bf16.mxu0 0
    %77 = vmatpush1.bf16.msra.mxu0 0
    %78 = vmatprep.subr.bf16.mxu0 0
    %79 = vmatpush1.bf16.msra.mxu0 0
    %80 = vmatprep.subr.bf16.mxu0 0
    %81 = vmatpush1.bf16.msra.mxu0 0
    %82 = vmatprep.subr.bf16.mxu0 0
    %83 = vmatpush1.bf16.msra.mxu0 0
    %84 = vmatprep.subr.bf16.mxu0 0
    %85 = vmatpush1.bf16.msra.mxu0 0
    %86 = vmatprep.subr.bf16.mxu0 0
    %87 = vmatpush1.bf16.msra.mxu0 0
    %88 = vmatprep.subr.bf16.mxu0 0
    %89 = vmatpush1.bf16.msra.mxu0 0
    %90 = vmatprep.mubr.bf16.mxu0 0
    %91 = vmatmul.mubr.bf16.gmra.mrb[0].mxu0 %v56
    %v92 = vpop.f32.mrb[0].mxu0
    %v93 = vadd.f32 0.0, %v92
    %v94 = vpop.f32.mrb[0].mxu0
    %v95 = vpop.f32.mrb[0].mxu0
    %v96 = vadd.f32 0.0, %v95
    %v97 = vpop.f32.mrb[0].mxu0
    %98 = vdwg.mxu0
    %v99 = vld [vmem:[#allocation2 + $0x10] sm:$0xf]
    %v100 = vld [vmem:[#allocation2 + $0x14] sm:$0xf]
    %v101 = vpack.c.bf16 %v96, %v93
    %v102 = vld [vmem:[#allocation2 + $0x18] sm:$0xf]
    %v103 = vld [vmem:[#allocation2 + $0x1c] sm:$0xf]
    %v106 = vunpack.c.l.b16 %v102
    %v107 = vunpack.c.l.b16 %v103
    %v108 = vpack.c.b16 %v107, %v106
    %v111 = vsel %vm54, %v101, 0
    %113 = vmatprep.subr.bf16.mxu0 0
    %114 = vmatpush1.bf16.msra.mxu0 %v108
    %115 = vmatprep.subr.bf16.mxu0 0
    %116 = vmatpush1.bf16.msra.mxu0 0
    %117 = vmatprep.subr.bf16.mxu0 0
    %118 = vmatpush1.bf16.msra.mxu0 0
    %119 = vmatprep.subr.bf16.mxu0 0
    %120 = vmatpush1.bf16.msra.mxu0 0
    %121 = vmatprep.subr.bf16.mxu0 0
    %122 = vmatpush1.bf16.msra.mxu0 0
    %123 = vmatprep.subr.bf16.mxu0 0
    %124 = vmatpush1.bf16.msra.mxu0 0
    %125 = vmatprep.subr.bf16.mxu0 0
    %126 = vmatpush1.bf16.msra.mxu0 0
    %127 = vmatprep.subr.bf16.mxu0 0
    %128 = vmatpush1.bf16.msra.mxu0 0
    %129 = vmatprep.subr.bf16.mxu0 0
    %130 = vmatpush1.bf16.msra.mxu0 0
    %131 = vmatprep.subr.bf16.mxu0 0
    %132 = vmatpush1.bf16.msra.mxu0 0
    %133 = vmatprep.subr.bf16.mxu0 0
    %134 = vmatpush1.bf16.msra.mxu0 0
    %135 = vmatprep.subr.bf16.mxu0 0
    %136 = vmatpush1.bf16.msra.mxu0 0
    %137 = vmatprep.subr.bf16.mxu0 0
    %138 = vmatpush1.bf16.msra.mxu0 0
    %139 = vmatprep.subr.bf16.mxu0 0
    %140 = vmatpush1.bf16.msra.mxu0 0
    %141 = vmatprep.subr.bf16.mxu0 0
    %142 = vmatpush1.bf16.msra.mxu0 0
    %143 = vmatprep.subr.bf16.mxu0 0
    %144 = vmatpush1.bf16.msra.mxu0 0
    %145 = vmatprep.mubr.bf16.mxu0 0
    %146 = vmatmul.mubr.bf16.gmra.mrb[0].mxu0 %v111
    %v147 = vpop.f32.mrb[0].mxu0
    %v148 = vadd.f32 0.0, %v147
    %v149 = vpop.f32.mrb[0].mxu0
    %v150 = vpop.f32.mrb[0].mxu0
    %v151 = vadd.f32 0.0, %v150
    %v152 = vpop.f32.mrb[0].mxu0
    %153 = vdwg.mxu0
    %v156 = vunpack.c.l.b16 %v99
    %v157 = vunpack.c.l.b16 %v100
    %v158 = vpack.c.b16 %v157, %v156
    %v161 = vsel %vm54, %v52, 0
    %163 = vmatprep.subr.bf16.mxu0 0
    %164 = vmatpush1.bf16.msra.mxu0 %v158
    %165 = vmatprep.subr.bf16.mxu0 0
    %166 = vmatpush1.bf16.msra.mxu0 0
    %167 = vmatprep.subr.bf16.mxu0 0
    %168 = vmatpush1.bf16.msra.mxu0 0
    %169 = vmatprep.subr.bf16.mxu0 0
    %170 = vmatpush1.bf16.msra.mxu0 0
    %171 = vmatprep.subr.bf16.mxu0 0
    %172 = vmatpush1.bf16.msra.mxu0 0
    %173 = vmatprep.subr.bf16.mxu0 0
    %174 = vmatpush1.bf16.msra.mxu0 0
    %175 = vmatprep.subr.bf16.mxu0 0
    %176 = vmatpush1.bf16.msra.mxu0 0
    %177 = vmatprep.subr.bf16.mxu0 0
    %178 = vmatpush1.bf16.msra.mxu0 0
    %179 = vmatprep.subr.bf16.mxu0 0
    %180 = vmatpush1.bf16.msra.mxu0 0
    %181 = vmatprep.subr.bf16.mxu0 0
    %182 = vmatpush1.bf16.msra.mxu0 0
    %183 = vmatprep.subr.bf16.mxu0 0
    %184 = vmatpush1.bf16.msra.mxu0 0
    %185 = vmatprep.subr.bf16.mxu0 0
    %186 = vmatpush1.bf16.msra.mxu0 0
    %187 = vmatprep.subr.bf16.mxu0 0
    %188 = vmatpush1.bf16.msra.mxu0 0
    %189 = vmatprep.subr.bf16.mxu0 0
    %190 = vmatpush1.bf16.msra.mxu0 0
    %191 = vmatprep.subr.bf16.mxu0 0
    %192 = vmatpush1.bf16.msra.mxu0 0
    %193 = vmatprep.subr.bf16.mxu0 0
    %194 = vmatpush1.bf16.msra.mxu0 0
    %195 = vmatprep.mubr.bf16.mxu0 0
    %196 = vmatmul.mubr.bf16.gmra.mrb[0].mxu0 %v161
    %v197 = vpop.f32.mrb[0].mxu0
    %v198 = vadd.f32 %v148, %v197
    %v199 = vpop.f32.mrb[0].mxu0
    %v200 = vpop.f32.mrb[0].mxu0
    %v201 = vadd.f32 %v151, %v200
    %v202 = vpop.f32.mrb[0].mxu0
    %203 = vdwg.mxu0
    %v204 = vld [vmem:[#allocation5] sm:$0x1]
    %v205 = vlaneseq
    %v206 = vshrl.u32 %v205, 7
    %v207 = vsub.s32 0, %v206
    %v208 = vrot.slane %v204, %v207
    %v209 = vadd.f32 %v198, %v208
    %v210 = vadd.f32 %v201, %v208
    %v211 = vtanh.pop %v209
    %v212 = vtanh.pop %v210
    %v213 = vpack.c.bf16 %v212, %v211
    %214 = vmatprep.subr.bf16.mxu0 0
    %215 = vmatpush1.bf16.msra.mxu0 %v213
    %216 = vmatprep.subr.bf16.mxu0 0
    %217 = vmatpush1.bf16.msra.mxu0 0
    %218 = vmatprep.subr.bf16.mxu0 0
    %219 = vmatpush1.bf16.msra.mxu0 0
    %220 = vmatprep.subr.bf16.mxu0 0
    %221 = vmatpush1.bf16.msra.mxu0 0
    %222 = vmatprep.subr.bf16.mxu0 0
    %223 = vmatpush1.bf16.msra.mxu0 0
    %224 = vmatprep.subr.bf16.mxu0 0
    %225 = vmatpush1.bf16.msra.mxu0 0
    %226 = vmatprep.subr.bf16.mxu0 0
    %227 = vmatpush1.bf16.msra.mxu0 0
    %228 = vmatprep.subr.bf16.mxu0 0
    %229 = vmatpush1.bf16.msra.mxu0 0
    %230 = vmatprep.subr.bf16.mxu0 0
    %231 = vmatpush1.bf16.msra.mxu0 0
    %232 = vmatprep.subr.bf16.mxu0 0
    %233 = vmatpush1.bf16.msra.mxu0 0
    %234 = vmatprep.subr.bf16.mxu0 0
    %235 = vmatpush1.bf16.msra.mxu0 0
    %236 = vmatprep.subr.bf16.mxu0 0
    %237 = vmatpush1.bf16.msra.mxu0 0
    %238 = vmatprep.subr.bf16.mxu0 0
    %239 = vmatpush1.bf16.msra.mxu0 0
    %240 = vmatprep.subr.bf16.mxu0 0
    %241 = vmatpush1.bf16.msra.mxu0 0
    %242 = vmatprep.subr.bf16.mxu0 0
    %243 = vmatpush1.bf16.msra.mxu0 0
    %244 = vmatprep.subr.bf16.mxu0 0
    %245 = vmatpush1.bf16.msra.mxu0 0
    %246 = vmatprep.mubr.bf16.mxu0 0
    %247 = vmatmul.mubr.bf16.gmra.mrb[0].mxu0 %v56
    %v248 = vpop.f32.mrb[0].mxu0
    %v249 = vadd.f32 0.0, %v248
    %v250 = vpop.f32.mrb[0].mxu0
    %v251 = vpop.f32.mrb[0].mxu0
    %v252 = vadd.f32 0.0, %v251
    %v253 = vpop.f32.mrb[0].mxu0
    %254 = vdwg.mxu0
    %v255 = vld [vmem:[#allocation2 + $0x20] sm:$0xf]
    %v256 = vld [vmem:[#allocation2 + $0x24] sm:$0xf]
    %v257 = vpack.c.bf16 %v252, %v249
    %v258 = vld [vmem:[#allocation2 + $0x28] sm:$0xf]
    %v259 = vld [vmem:[#allocation2 + $0x2c] sm:$0xf]
    %v262 = vunpack.c.l.b16 %v258
    %v263 = vunpack.c.l.b16 %v259
    %v264 = vpack.c.b16 %v263, %v262
    %v267 = vsel %vm54, %v257, 0
    %269 = vmatprep.subr.bf16.mxu0 0
    %270 = vmatpush1.bf16.msra.mxu0 %v264
    %271 = vmatprep.subr.bf16.mxu0 0
    %272 = vmatpush1.bf16.msra.mxu0 0
    %273 = vmatprep.subr.bf16.mxu0 0
    %274 = vmatpush1.bf16.msra.mxu0 0
    %275 = vmatprep.subr.bf16.mxu0 0
    %276 = vmatpush1.bf16.msra.mxu0 0
    %277 = vmatprep.subr.bf16.mxu0 0
    %278 = vmatpush1.bf16.msra.mxu0 0
    %279 = vmatprep.subr.bf16.mxu0 0
    %280 = vmatpush1.bf16.msra.mxu0 0
    %281 = vmatprep.subr.bf16.mxu0 0
    %282 = vmatpush1.bf16.msra.mxu0 0
    %283 = vmatprep.subr.bf16.mxu0 0
    %284 = vmatpush1.bf16.msra.mxu0 0
    %285 = vmatprep.subr.bf16.mxu0 0
    %286 = vmatpush1.bf16.msra.mxu0 0
    %287 = vmatprep.subr.bf16.mxu0 0
    %288 = vmatpush1.bf16.msra.mxu0 0
    %289 = vmatprep.subr.bf16.mxu0 0
    %290 = vmatpush1.bf16.msra.mxu0 0
    %291 = vmatprep.subr.bf16.mxu0 0
    %292 = vmatpush1.bf16.msra.mxu0 0
    %293 = vmatprep.subr.bf16.mxu0 0
    %294 = vmatpush1.bf16.msra.mxu0 0
    %295 = vmatprep.subr.bf16.mxu0 0
    %296 = vmatpush1.bf16.msra.mxu0 0
    %297 = vmatprep.subr.bf16.mxu0 0
    %298 = vmatpush1.bf16.msra.mxu0 0
    %299 = vmatprep.subr.bf16.mxu0 0
    %300 = vmatpush1.bf16.msra.mxu0 0
    %301 = vmatprep.mubr.bf16.mxu0 0
    %302 = vmatmul.mubr.bf16.gmra.mrb[0].mxu0 %v267
    %v303 = vpop.f32.mrb[0].mxu0
    %v304 = vadd.f32 0.0, %v303
    %v305 = vpop.f32.mrb[0].mxu0
    %v306 = vpop.f32.mrb[0].mxu0
    %v307 = vadd.f32 0.0, %v306
    %v308 = vpop.f32.mrb[0].mxu0
    %309 = vdwg.mxu0
    %v312 = vunpack.c.l.b16 %v255
    %v313 = vunpack.c.l.b16 %v256
    %v314 = vpack.c.b16 %v313, %v312
    %v317 = vsel %vm54, %v213, 0
    %319 = vmatprep.subr.bf16.mxu0 0
    %320 = vmatpush1.bf16.msra.mxu0 %v314
    %321 = vmatprep.subr.bf16.mxu0 0
    %322 = vmatpush1.bf16.msra.mxu0 0
    %323 = vmatprep.subr.bf16.mxu0 0
    %324 = vmatpush1.bf16.msra.mxu0 0
    %325 = vmatprep.subr.bf16.mxu0 0
    %326 = vmatpush1.bf16.msra.mxu0 0
    %327 = vmatprep.subr.bf16.mxu0 0
    %328 = vmatpush1.bf16.msra.mxu0 0
    %329 = vmatprep.subr.bf16.mxu0 0
    %330 = vmatpush1.bf16.msra.mxu0 0
    %331 = vmatprep.subr.bf16.mxu0 0
    %332 = vmatpush1.bf16.msra.mxu0 0
    %333 = vmatprep.subr.bf16.mxu0 0
    %334 = vmatpush1.bf16.msra.mxu0 0
    %335 = vmatprep.subr.bf16.mxu0 0
    %336 = vmatpush1.bf16.msra.mxu0 0
    %337 = vmatprep.subr.bf16.mxu0 0
    %338 = vmatpush1.bf16.msra.mxu0 0
    %339 = vmatprep.subr.bf16.mxu0 0
    %340 = vmatpush1.bf16.msra.mxu0 0
    %341 = vmatprep.subr.bf16.mxu0 0
    %342 = vmatpush1.bf16.msra.mxu0 0
    %343 = vmatprep.subr.bf16.mxu0 0
    %344 = vmatpush1.bf16.msra.mxu0 0
    %345 = vmatprep.subr.bf16.mxu0 0
    %346 = vmatpush1.bf16.msra.mxu0 0
    %347 = vmatprep.subr.bf16.mxu0 0
    %348 = vmatpush1.bf16.msra.mxu0 0
    %349 = vmatprep.subr.bf16.mxu0 0
    %350 = vmatpush1.bf16.msra.mxu0 0
    %351 = vmatprep.mubr.bf16.mxu0 0
    %352 = vmatmul.mubr.bf16.gmra.mrb[0].mxu0 %v317
    %v353 = vpop.f32.mrb[0].mxu0
    %v354 = vadd.f32 %v304, %v353
    %v355 = vpop.f32.mrb[0].mxu0
    %v356 = vpop.f32.mrb[0].mxu0
    %v357 = vadd.f32 %v307, %v356
    %v358 = vpop.f32.mrb[0].mxu0
    %359 = vdwg.mxu0
    %v360 = vld [vmem:[#allocation5 + $0x1] sm:$0x1]
    %v361 = vlaneseq
    %v362 = vshrl.u32 %v361, 7
    %v363 = vsub.s32 0, %v362
    %v364 = vrot.slane %v360, %v363
    %v365 = vadd.f32 %v354, %v364
    %v366 = vadd.f32 %v357, %v364
    %v367 = vtanh.pop %v365
    %v368 = vtanh.pop %v366
    %v369 = vpack.c.bf16 %v368, %v367
    %370 = vmatprep.subr.bf16.mxu0 0
    %371 = vmatpush1.bf16.msra.mxu0 %v369
    %372 = vmatprep.subr.bf16.mxu0 0
    %373 = vmatpush1.bf16.msra.mxu0 0
    %374 = vmatprep.subr.bf16.mxu0 0
    %375 = vmatpush1.bf16.msra.mxu0 0
    %376 = vmatprep.subr.bf16.mxu0 0
    %377 = vmatpush1.bf16.msra.mxu0 0
    %378 = vmatprep.subr.bf16.mxu0 0
    %379 = vmatpush1.bf16.msra.mxu0 0
    %380 = vmatprep.subr.bf16.mxu0 0
    %381 = vmatpush1.bf16.msra.mxu0 0
    %382 = vmatprep.subr.bf16.mxu0 0
    %383 = vmatpush1.bf16.msra.mxu0 0
    %384 = vmatprep.subr.bf16.mxu0 0
    %385 = vmatpush1.bf16.msra.mxu0 0
    %386 = vmatprep.subr.bf16.mxu0 0
    %387 = vmatpush1.bf16.msra.mxu0 0
    %388 = vmatprep.subr.bf16.mxu0 0
    %389 = vmatpush1.bf16.msra.mxu0 0
    %390 = vmatprep.subr.bf16.mxu0 0
    %391 = vmatpush1.bf16.msra.mxu0 0
    %392 = vmatprep.subr.bf16.mxu0 0
    %393 = vmatpush1.bf16.msra.mxu0 0
    %394 = vmatprep.subr.bf16.mxu0 0
    %395 = vmatpush1.bf16.msra.mxu0 0
    %396 = vmatprep.subr.bf16.mxu0 0
    %397 = vmatpush1.bf16.msra.mxu0 0
    %398 = vmatprep.subr.bf16.mxu0 0
    %399 = vmatpush1.bf16.msra.mxu0 0
    %400 = vmatprep.subr.bf16.mxu0 0
    %401 = vmatpush1.bf16.msra.mxu0 0
    %402 = vmatprep.mubr.bf16.mxu0 0
    %403 = vmatmul.mubr.bf16.gmra.mrb[0].mxu0 %v56
    %v404 = vpop.f32.mrb[0].mxu0
    %v405 = vadd.f32 0.0, %v404
    %v406 = vpop.f32.mrb[0].mxu0
    %v407 = vpop.f32.mrb[0].mxu0
    %v408 = vadd.f32 0.0, %v407
    %v409 = vpop.f32.mrb[0].mxu0
    %410 = vdwg.mxu0
    %v411 = vld [vmem:[#allocation2 + $0x30] sm:$0xf]
    %v412 = vld [vmem:[#allocation2 + $0x34] sm:$0xf]
    %v413 = vpack.c.bf16 %v408, %v405
    %v414 = vld [vmem:[#allocation2 + $0x38] sm:$0xf]
    %v415 = vld [vmem:[#allocation2 + $0x3c] sm:$0xf]
    %v418 = vunpack.c.l.b16 %v414
    %v419 = vunpack.c.l.b16 %v415
    %v420 = vpack.c.b16 %v419, %v418
    %v423 = vsel %vm54, %v413, 0
    %425 = vmatprep.subr.bf16.mxu0 0
    %426 = vmatpush1.bf16.msra.mxu0 %v420
    %427 = vmatprep.subr.bf16.mxu0 0
    %428 = vmatpush1.bf16.msra.mxu0 0
    %429 = vmatprep.subr.bf16.mxu0 0
    %430 = vmatpush1.bf16.msra.mxu0 0
    %431 = vmatprep.subr.bf16.mxu0 0
    %432 = vmatpush1.bf16.msra.mxu0 0
    %433 = vmatprep.subr.bf16.mxu0 0
    %434 = vmatpush1.bf16.msra.mxu0 0
    %435 = vmatprep.subr.bf16.mxu0 0
    %436 = vmatpush1.bf16.msra.mxu0 0
    %437 = vmatprep.subr.bf16.mxu0 0
    %438 = vmatpush1.bf16.msra.mxu0 0
    %439 = vmatprep.subr.bf16.mxu0 0
    %440 = vmatpush1.bf16.msra.mxu0 0
    %441 = vmatprep.subr.bf16.mxu0 0
    %442 = vmatpush1.bf16.msra.mxu0 0
    %443 = vmatprep.subr.bf16.mxu0 0
    %444 = vmatpush1.bf16.msra.mxu0 0
    %445 = vmatprep.subr.bf16.mxu0 0
    %446 = vmatpush1.bf16.msra.mxu0 0
    %447 = vmatprep.subr.bf16.mxu0 0
    %448 = vmatpush1.bf16.msra.mxu0 0
    %449 = vmatprep.subr.bf16.mxu0 0
    %450 = vmatpush1.bf16.msra.mxu0 0
    %451 = vmatprep.subr.bf16.mxu0 0
    %452 = vmatpush1.bf16.msra.mxu0 0
    %453 = vmatprep.subr.bf16.mxu0 0
    %454 = vmatpush1.bf16.msra.mxu0 0
    %455 = vmatprep.subr.bf16.mxu0 0
    %456 = vmatpush1.bf16.msra.mxu0 0
    %457 = vmatprep.mubr.bf16.mxu0 0
    %458 = vmatmul.mubr.bf16.gmra.mrb[0].mxu0 %v423
    %v459 = vpop.f32.mrb[0].mxu0
    %v460 = vadd.f32 0.0, %v459
    %v461 = vpop.f32.mrb[0].mxu0
    %v462 = vpop.f32.mrb[0].mxu0
    %v463 = vadd.f32 0.0, %v462
    %v464 = vpop.f32.mrb[0].mxu0
    %465 = vdwg.mxu0
    %v468 = vunpack.c.l.b16 %v411
    %v469 = vunpack.c.l.b16 %v412
    %v470 = vpack.c.b16 %v469, %v468
    %v473 = vsel %vm54, %v369, 0
    %475 = vmatprep.subr.bf16.mxu0 0
    %476 = vmatpush1.bf16.msra.mxu0 %v470
    %477 = vmatprep.subr.bf16.mxu0 0
    %478 = vmatpush1.bf16.msra.mxu0 0
    %479 = vmatprep.subr.bf16.mxu0 0
    %480 = vmatpush1.bf16.msra.mxu0 0
    %481 = vmatprep.subr.bf16.mxu0 0
    %482 = vmatpush1.bf16.msra.mxu0 0
    %483 = vmatprep.subr.bf16.mxu0 0
    %484 = vmatpush1.bf16.msra.mxu0 0
    %485 = vmatprep.subr.bf16.mxu0 0
    %486 = vmatpush1.bf16.msra.mxu0 0
    %487 = vmatprep.subr.bf16.mxu0 0
    %488 = vmatpush1.bf16.msra.mxu0 0
    %489 = vmatprep.subr.bf16.mxu0 0
    %490 = vmatpush1.bf16.msra.mxu0 0
    %491 = vmatprep.subr.bf16.mxu0 0
    %492 = vmatpush1.bf16.msra.mxu0 0
    %493 = vmatprep.subr.bf16.mxu0 0
    %494 = vmatpush1.bf16.msra.mxu0 0
    %495 = vmatprep.subr.bf16.mxu0 0
    %496 = vmatpush1.bf16.msra.mxu0 0
    %497 = vmatprep.subr.bf16.mxu0 0
    %498 = vmatpush1.bf16.msra.mxu0 0
    %499 = vmatprep.subr.bf16.mxu0 0
    %500 = vmatpush1.bf16.msra.mxu0 0
    %501 = vmatprep.subr.bf16.mxu0 0
    %502 = vmatpush1.bf16.msra.mxu0 0
    %503 = vmatprep.subr.bf16.mxu0 0
    %504 = vmatpush1.bf16.msra.mxu0 0
    %505 = vmatprep.subr.bf16.mxu0 0
    %506 = vmatpush1.bf16.msra.mxu0 0
    %507 = vmatprep.mubr.bf16.mxu0 0
    %508 = vmatmul.mubr.bf16.gmra.mrb[0].mxu0 %v473
    %v509 = vpop.f32.mrb[0].mxu0
    %v510 = vadd.f32 %v460, %v509
    %v511 = vpop.f32.mrb[0].mxu0
    %v512 = vpop.f32.mrb[0].mxu0
    %v513 = vadd.f32 %v463, %v512
    %v514 = vpop.f32.mrb[0].mxu0
    %515 = vdwg.mxu0
    %v516 = vld [vmem:[#allocation5 + $0x2] sm:$0x1]
    %v517 = vlaneseq
    %v518 = vshrl.u32 %v517, 7
    %v519 = vsub.s32 0, %v518
    %v520 = vrot.slane %v516, %v519
    %v521 = vadd.f32 %v510, %v520
    %v522 = vadd.f32 %v513, %v520
    %v523 = vtanh.pop %v521
    %v524 = vtanh.pop %v522
    %v525 = vpack.c.bf16 %v524, %v523
    %v526 = vld [vmem:[#allocation2 + $0x40] sm:$0xf]
    %v527 = vld [vmem:[#allocation2 + $0x44] sm:$0xf]
    %v528 = vld [vmem:[#allocation5 + $0x3] sm:$0x1]
    %v529 = vlaneseq
    %v530 = vshrl.u32 %v529, 7
    %v531 = vsub.s32 0, %v530
    %v532 = vrot.slane %v528, %v531
    %v535 = vunpack.c.l.b16 %v526
    %v536 = vunpack.c.l.b16 %v527
    %v537 = vpack.c.b16 %v536, %v535
    %v540 = vsel %vm54, %v525, 0
    %542 = vmatprep.subr.bf16.mxu0 0
    %543 = vmatpush1.bf16.msra.mxu0 %v537
    %544 = vmatprep.subr.bf16.mxu0 0
    %545 = vmatpush1.bf16.msra.mxu0 0
    %546 = vmatprep.subr.bf16.mxu0 0
    %547 = vmatpush1.bf16.msra.mxu0 0
    %548 = vmatprep.subr.bf16.mxu0 0
    %549 = vmatpush1.bf16.msra.mxu0 0
    %550 = vmatprep.subr.bf16.mxu0 0
    %551 = vmatpush1.bf16.msra.mxu0 0
    %552 = vmatprep.subr.bf16.mxu0 0
    %553 = vmatpush1.bf16.msra.mxu0 0
    %554 = vmatprep.subr.bf16.mxu0 0
    %555 = vmatpush1.bf16.msra.mxu0 0
    %556 = vmatprep.subr.bf16.mxu0 0
    %557 = vmatpush1.bf16.msra.mxu0 0
    %558 = vmatprep.subr.bf16.mxu0 0
    %559 = vmatpush1.bf16.msra.mxu0 0
    %560 = vmatprep.subr.bf16.mxu0 0
    %561 = vmatpush1.bf16.msra.mxu0 0
    %562 = vmatprep.subr.bf16.mxu0 0
    %563 = vmatpush1.bf16.msra.mxu0 0
    %564 = vmatprep.subr.bf16.mxu0 0
    %565 = vmatpush1.bf16.msra.mxu0 0
    %566 = vmatprep.subr.bf16.mxu0 0
    %567 = vmatpush1.bf16.msra.mxu0 0
    %568 = vmatprep.subr.bf16.mxu0 0
    %569 = vmatpush1.bf16.msra.mxu0 0
    %570 = vmatprep.subr.bf16.mxu0 0
    %571 = vmatpush1.bf16.msra.mxu0 0
    %572 = vmatprep.subr.bf16.mxu0 0
    %573 = vmatpush1.bf16.msra.mxu0 0
    %574 = vmatprep.mubr.bf16.mxu0 0
    %575 = vmatmul.mubr.bf16.gmra.mrb[0].mxu0 %v540
    %v576 = vpop.f32.mrb[0].mxu0
    %v577 = vadd.f32 %v532, %v576
    %v578 = vpop.f32.mrb[0].mxu0
    %v579 = vpop.f32.mrb[0].mxu0
    %v580 = vadd.f32 %v532, %v579
    %v581 = vpop.f32.mrb[0].mxu0
    %582 = vdwg.mxu0
    %v583 = vtanh.pop %v577
    %v584 = vtanh.pop %v580
    %v585 = vpack.c.bf16 %v584, %v583
    %v586 = vld [vmem:[#allocation2 + $0x48] sm:$0xf]
    %v587 = vld [vmem:[#allocation2 + $0x4c] sm:$0xf]
    %v588 = vld [vmem:[#allocation5 + $0x4] sm:$0x1]
    %v589 = vlaneseq
    %v590 = vshrl.u32 %v589, 7
    %v591 = vsub.s32 0, %v590
    %v592 = vrot.slane %v588, %v591
    %v595 = vunpack.c.l.b16 %v586
    %v596 = vunpack.c.l.b16 %v587
    %v597 = vpack.c.b16 %v596, %v595
    %v600 = vsel %vm54, %v585, 0
    %602 = vmatprep.subr.bf16.mxu0 0
    %603 = vmatpush1.bf16.msra.mxu0 %v597
    %604 = vmatprep.subr.bf16.mxu0 0
    %605 = vmatpush1.bf16.msra.mxu0 0
    %606 = vmatprep.subr.bf16.mxu0 0
    %607 = vmatpush1.bf16.msra.mxu0 0
    %608 = vmatprep.subr.bf16.mxu0 0
    %609 = vmatpush1.bf16.msra.mxu0 0
    %610 = vmatprep.subr.bf16.mxu0 0
    %611 = vmatpush1.bf16.msra.mxu0 0
    %612 = vmatprep.subr.bf16.mxu0 0
    %613 = vmatpush1.bf16.msra.mxu0 0
    %614 = vmatprep.subr.bf16.mxu0 0
    %615 = vmatpush1.bf16.msra.mxu0 0
    %616 = vmatprep.subr.bf16.mxu0 0
    %617 = vmatpush1.bf16.msra.mxu0 0
    %618 = vmatprep.subr.bf16.mxu0 0
    %619 = vmatpush1.bf16.msra.mxu0 0
    %620 = vmatprep.subr.bf16.mxu0 0
    %621 = vmatpush1.bf16.msra.mxu0 0
    %622 = vmatprep.subr.bf16.mxu0 0
    %623 = vmatpush1.bf16.msra.mxu0 0
    %624 = vmatprep.subr.bf16.mxu0 0
    %625 = vmatpush1.bf16.msra.mxu0 0
    %626 = vmatprep.subr.bf16.mxu0 0
    %627 = vmatpush1.bf16.msra.mxu0 0
    %628 = vmatprep.subr.bf16.mxu0 0
    %629 = vmatpush1.bf16.msra.mxu0 0
    %630 = vmatprep.subr.bf16.mxu0 0
    %631 = vmatpush1.bf16.msra.mxu0 0
    %632 = vmatprep.subr.bf16.mxu0 0
    %633 = vmatpush1.bf16.msra.mxu0 0
    %634 = vmatprep.mubr.bf16.mxu0 0
    %635 = vmatmul.mubr.bf16.gmra.mrb[0].mxu0 %v600
    %v636 = vpop.f32.mrb[0].mxu0
    %v637 = vadd.f32 %v592, %v636
    %v638 = vpop.f32.mrb[0].mxu0
    %v639 = vpop.f32.mrb[0].mxu0
    %v640 = vadd.f32 %v592, %v639
    %v641 = vpop.f32.mrb[0].mxu0
    %642 = vdwg.mxu0
    %v643 = vtanh.pop %v637
    %v644 = vtanh.pop %v640
    %v645 = vpack.c.bf16 %v644, %v643
    %v646 = vld [vmem:[#allocation2 + $0x50] sm:$0xf]
    %v647 = vld [vmem:[#allocation2 + $0x54] sm:$0xf]
    %v648 = vld [vmem:[#allocation5 + $0x5] sm:$0x1]
    %v649 = vlaneseq
    %v650 = vshrl.u32 %v649, 7
    %v651 = vsub.s32 0, %v650
    %v652 = vrot.slane %v648, %v651
    %v655 = vunpack.c.l.b16 %v646
    %v656 = vunpack.c.l.b16 %v647
    %v657 = vpack.c.b16 %v656, %v655
    %v660 = vsel %vm54, %v645, 0
    %662 = vmatprep.subr.bf16.mxu0 0
    %663 = vmatpush1.bf16.msra.mxu0 %v657
    %664 = vmatprep.subr.bf16.mxu0 0
    %665 = vmatpush1.bf16.msra.mxu0 0
    %666 = vmatprep.subr.bf16.mxu0 0
    %667 = vmatpush1.bf16.msra.mxu0 0
    %668 = vmatprep.subr.bf16.mxu0 0
    %669 = vmatpush1.bf16.msra.mxu0 0
    %670 = vmatprep.subr.bf16.mxu0 0
    %671 = vmatpush1.bf16.msra.mxu0 0
    %672 = vmatprep.subr.bf16.mxu0 0
    %673 = vmatpush1.bf16.msra.mxu0 0
    %674 = vmatprep.subr.bf16.mxu0 0
    %675 = vmatpush1.bf16.msra.mxu0 0
    %676 = vmatprep.subr.bf16.mxu0 0
    %677 = vmatpush1.bf16.msra.mxu0 0
    %678 = vmatprep.subr.bf16.mxu0 0
    %679 = vmatpush1.bf16.msra.mxu0 0
    %680 = vmatprep.subr.bf16.mxu0 0
    %681 = vmatpush1.bf16.msra.mxu0 0
    %682 = vmatprep.subr.bf16.mxu0 0
    %683 = vmatpush1.bf16.msra.mxu0 0
    %684 = vmatprep.subr.bf16.mxu0 0
    %685 = vmatpush1.bf16.msra.mxu0 0
    %686 = vmatprep.subr.bf16.mxu0 0
    %687 = vmatpush1.bf16.msra.mxu0 0
    %688 = vmatprep.subr.bf16.mxu0 0
    %689 = vmatpush1.bf16.msra.mxu0 0
    %690 = vmatprep.subr.bf16.mxu0 0
    %691 = vmatpush1.bf16.msra.mxu0 0
    %692 = vmatprep.subr.bf16.mxu0 0
    %693 = vmatpush1.bf16.msra.mxu0 0
    %694 = vmatprep.mubr.bf16.mxu0 0
    %695 = vmatmul.mubr.bf16.gmra.mrb[0].mxu0 %v660
    %v696 = vpop.f32.mrb[0].mxu0
    %v697 = vadd.f32 %v652, %v696
    %v698 = vpop.f32.mrb[0].mxu0
    %v699 = vpop.f32.mrb[0].mxu0
    %v700 = vadd.f32 %v652, %v699
    %v701 = vpop.f32.mrb[0].mxu0
    %702 = vdwg.mxu0
    %v703 = vlaneseq
    %v704 = vand.u32 %v703, 127
    %vm705 = vcmp.lt.s32.totalorder %v704, 2
    %v706 = vsel %vm705, %v697, -inf
    %v707 = vsel %vm705, %v700, -inf
    %708 = vmax.xlane.f32.xlu0 %v706
    %v709 = vpop.xlane.xlu0 %708
    %710 = vmax.xlane.f32.xlu0 %v707
    %v711 = vpop.xlane.xlu0 %710
    %v712 = vsub.f32 %v706, %v709
    %v713 = vsub.f32 %v707, %v711
    %v714 = vmul.f32 %v712, 1.442695
    %v715 = vpow.pop %v714
    %v716 = vmul.f32 %v713, 1.442695
    %v717 = vpow.pop %v716
    %718 = vadd.xlane.f32.xlu0 %v715
    %v719 = vpop.xlane.xlu0 %718
    %720 = vadd.xlane.f32.xlu0 %v717
    %v721 = vpop.xlane.xlu0 %720
    %v722 = vrcp.pop %v719
    %v723 = vrcp.pop %v721
    %v724 = vmul.f32 %v715, %v722
    %v725 = vmul.f32 %v717, %v723
    %726 = vst [vmem:[#allocation7] sm:$0xff] %v724
    %727 = vst [vmem:[#allocation7 + $0x8] sm:$0xff] %v725
    // Predicated region
    $region18: #{tpu_custom_call.1} parent=1 // pred_check
      _
    $region19: #{tpu_custom_call.1} parent=1 // pred_check_branch
      %729 = sbr.rel (0) target = $region21
    $region20: #{tpu_custom_call.1} parent=1 // pred_region
      %s731 = ssub.s32 256, 256
      %732 = vsyncadd [#allocation4], %s731
      %s733 = sshll.u32 [#allocation7], 4
      %s734 = int_to_ptr.vmem [resolvable:$true] %s733
      %739 = dma.vmem_to_hbm [thread:$0]  %s734, 256, %s2, [#allocation4], 128, 128, 8
    $region21: #{tpu_custom_call.1} parent=1 // pred_fallthru
      _
    // Predicated region
    $region22: #{tpu_custom_call.1} parent=1 // pred_check
      _
    $region23: #{tpu_custom_call.1} parent=1 // pred_check_branch
      %741 = sbr.rel (0) target = $region25
    $region24: #{tpu_custom_call.1} parent=1 // pred_region
      %742 = dma.done [#allocation4], 256
    $region25: #{tpu_custom_call.1} parent=1 // pred_fallthru
      _
    %743 = vsyncpa [#allocation3], 1
    %744 = vsyncpa [#allocation6], 1
    %745 = vsyncpa [#allocation4], 1

</llo_original>
